<compile_context>
chip_gen: v5e
topology: v5e:2x2
jax: 0.10.0
libtpu: 0.0.40
codegen_flags: <defaults>
</compile_context>

<pallas_src>
import math
from functools import partial

import jax
import jax.numpy as jnp
from jax.experimental import pallas as pl
from jax.experimental.pallas import tpu as pltpu

FEAT = 17                     # feature axis of the PyTorch module
LANES = 128                   # TPU lane count (vreg fast axis)
LANE_WIDTH = FEAT * LANES     # 2176 = lane-dense width of the reshaped buffer
TILE_ROWS = 1024              # ~8.5 MiB f32 per block (sweep 256/512 on v5e if
                              # standalone perf there matters; 1024 still fits
                              # with the explicit vmem limit below)
VMEM_LIMIT_BYTES = 44 << 20   # > 2x(in+out) double-buffered tiles, < 64 MiB (v7x)

# Constant buffers from the module's __init__ (deterministic, not trainable).
SCALER_SCALE = jnp.array(
    [5.009924761018587, 1.0018188597242355, 0.010292174692060528,
     0.16288265085698453, 0.04559109321673852, 0.1682473240927026,
     0.15967887456557378, 0.0015586544595969428, 0.010722259319073196,
     0.6364301120505811, 0.6360764093711175, 0.6353961809445742,
     0.31929392780031585, 0.6707174031592557, 0.6534433964656056,
     0.002462418781983633, 12.514212104101508],
    dtype=jnp.float32,
)
SCALER_MIN = jnp.array(
    [0.49977842782898685, 0.4994941706919238, -0.020606080641338675,
     0.5002919753099604, -0.009400341457049127, 0.49997065712986616,
     0.4996155459607123, -0.033067499716928135, -0.05139944510782373,
     -0.0005472203187390946, -8.2416517989992e-05, -3.700403245065246e-05,
     -0.0003170755908927612, -1.2027876307280915e-06, -7.862871723487552e-05,
     -1.7337162673375185e-06, -11.51308429548884],
    dtype=jnp.float32,
)

# Lane-dense constants, stacked: row 0 = scale, row 1 = min.  Element j of the
# tiled row is SCALER_*[j % 17], matching the row-major view of
# (batch, 17) -> (batch/128, 2176).
SCALE_MIN_TILED = jnp.stack(
    [jnp.tile(SCALER_SCALE, LANES), jnp.tile(SCALER_MIN, LANES)], axis=0
)  # (2, LANE_WIDTH)


def _feature_scaler_kernel(x_ref, sm_ref, o_ref):
    # Pure VPU elementwise affine; (1, W) scale/min broadcast over the tile rows.
    x = x_ref[...].astype(jnp.float32)
    scale = sm_ref[0:1, :]
    offset = sm_ref[1:2, :]
    o_ref[...] = (x * scale + offset).astype(o_ref.dtype)


def _sublane_multiple(dtype) -> int:
    # Minimum second-to-last block dim: f32 -> 8, bf16/f16 -> 16, int8/fp8 -> 32.
    return 32 // jnp.dtype(dtype).itemsize


def _run_aligned(x2, tb, out_dtype):
    """Kernel over the lane-dense aligned prefix x2: (rows, LANE_WIDTH)."""
    rows = x2.shape[0]
    grid = (pl.cdiv(rows, tb),)  # uneven last block: OOB reads padded, writes dropped
    return pl.pallas_call(
        _feature_scaler_kernel,
        out_shape=jax.ShapeDtypeStruct((rows, LANE_WIDTH), out_dtype),
        grid=grid,
        in_specs=[
            pl.BlockSpec((tb, LANE_WIDTH), lambda i: (i, 0)),
            # Constant block index -> fetched into VMEM once, never re-DMA'd.
            pl.BlockSpec((2, LANE_WIDTH), lambda i: (0, 0)),
        ],
        out_specs=pl.BlockSpec((tb, LANE_WIDTH), lambda i: (i, 0)),
        compiler_params=pltpu.CompilerParams(
            dimension_semantics=("parallel",),   # batch axis may shard on v7x megacore
            vmem_limit_bytes=VMEM_LIMIT_BYTES,
        ),
    )(x2, SCALE_MIN_TILED)


@partial(jax.jit, static_argnames=("tile_rows", "out_dtype"))
def feature_scaler(x: jax.Array, *, tile_rows: int | None = None,
                   out_dtype=None) -> jax.Array:
    """out = x * scaler_scale + scaler_min over the last (17) axis.

    Accepts any shape (..., 17).  Default output dtype matches PyTorch promotion
    (float32); pass out_dtype=jnp.bfloat16 to halve write traffic when the
    consumer accepts bf16.
    """
    assert x.shape[-1] == FEAT, f"feature dim must be {FEAT}, got {x.shape[-1]}"
    lead_shape = x.shape[:-1]
    batch = math.prod(lead_shape)
    if out_dtype is None:
        out_dtype = jnp.promote_types(x.dtype, jnp.float32)
    out_dtype = jnp.dtype(out_dtype)

    x_flat = x.reshape(batch, FEAT)
    batch_main = (batch // LANES) * LANES     # aligned prefix handled by the kernel
    rows = batch_main // LANES

    parts = []
    if rows > 0:
        tb = min(TILE_ROWS if tile_rows is None else tile_rows, rows)
        req = max(_sublane_multiple(x.dtype), _sublane_multiple(out_dtype))
        if tb < rows and tb % req != 0:
            raise ValueError(
                f"tile_rows must be a multiple of {req} for dtypes "
                f"({x.dtype}, {out_dtype})")
        # Row-major contiguous view: lane-dense, every vreg / store uses 128 lanes.
        x2 = x_flat[:batch_main].reshape(rows, LANE_WIDTH)
        out2 = _run_aligned(x2, tb, out_dtype)
        parts.append(out2.reshape(batch_main, FEAT))

    if batch_main < batch:
        # <=127-row tail: plain JAX (tiny), avoids a full pad/slice HBM pass.
        x_tail = x_flat[batch_main:]
        tail = (x_tail.astype(jnp.float32) * SCALER_SCALE + SCALER_MIN
                ).astype(out_dtype)
        parts.append(tail)

    out = parts[0] if len(parts) == 1 else jnp.concatenate(parts, axis=0)
    return out.reshape(*lead_shape, FEAT)


if __name__ == "__main__":
    key = jax.random.PRNGKey(0)

    # (shape, tile_rows, out_dtype):
    #   (256, 17)        aligned batch (rows=2), single-block kernel, no tail
    #   (200, 17)        128 aligned rows via kernel + 72-row JAX tail + concat
    #   (2048, 17)       rows=16 with tile_rows=8 -> 2-step pipelined grid
    #   (40, 17)         < 128 rows -> pure JAX tail path (no kernel launch)
    #   (2, 4, 32, 17)   extra leading dims, batch=256, aligned
    tests = [
        ((256, FEAT), None, None),
        ((200, FEAT), None, None),
        ((2048, FEAT), 8, None),
        ((40, FEAT), None, None),
        ((2, 4, 32, FEAT), None, None),
    ]

    for shape, tr, od in tests:
        key, sub = jax.random.split(key)
        x = jax.random.normal(sub, shape, dtype=jnp.float32)

        out = feature_scaler(x, tile_rows=tr, out_dtype=od)
        jax.block_until_ready(out)

        ref = x * SCALER_SCALE + SCALER_MIN   # plain-JAX reference (== PyTorch fwd)
        assert out.shape == x.shape, (out.shape, x.shape)
        assert out.dtype == jnp.float32, out.dtype
        assert jnp.allclose(out, ref, atol=1e-4, rtol=1e-5), f"mismatch for {shape}"

    # bf16 output option (compute in f32, store bf16) — aligned batch.
    key, sub = jax.random.split(key)
    xb = jax.random.normal(sub, (256, FEAT), dtype=jnp.bfloat16)
    outb = feature_scaler(xb, out_dtype=jnp.bfloat16)
    jax.block_until_ready(outb)
    refb = xb.astype(jnp.float32) * SCALER_SCALE + SCALER_MIN
    assert outb.dtype == jnp.bfloat16
    assert jnp.allclose(outb.astype(jnp.float32), refb, atol=0.2, rtol=0.02)

    print("KERNEL_OK")
</pallas_src>

<mosaic_0001>
module attributes {stable_mosaic.version = 11 : i64} {
  func.func @_feature_scaler_kernel(%arg0: i32, %arg1: memref<2x2176xf32, #tpu.memory_space<vmem>>, %arg2: memref<2x2176xf32, #tpu.memory_space<vmem>>, %arg3: memref<2x2176xf32, #tpu.memory_space<vmem>>) attributes {dimension_semantics = [#tpu.dimension_semantics<parallel>], iteration_bounds = array<i64: 1>, scalar_prefetch = 0 : i64, scratch_operands = 0 : i64, tpu.core_type = #tpu.core_type<tc>, window_params = [{transform_indices = @transform_0, window_bounds = array<i64: 2, 2176>}, {pipeline_mode = #tpu.pipeline_mode<synchronous>, transform_indices = @transform_1, window_bounds = array<i64: 2, 2176>}, {transform_indices = @transform_2, window_bounds = array<i64: 2, 2176>}]} {
    %c0 = arith.constant 0 : index
    %c0_0 = arith.constant 0 : index
    %0 = vector.load %arg1[%c0, %c0_0] : memref<2x2176xf32, #tpu.memory_space<vmem>>, vector<2x2176xf32>
    %c0_1 = arith.constant 0 : index
    %c0_2 = arith.constant 0 : index
    %1 = vector.load %arg2[%c0_1, %c0_2] : memref<2x2176xf32, #tpu.memory_space<vmem>>, vector<1x2176xf32>
    %c1 = arith.constant 1 : index
    %c0_3 = arith.constant 0 : index
    %2 = vector.load %arg2[%c1, %c0_3] : memref<2x2176xf32, #tpu.memory_space<vmem>>, vector<1x2176xf32>
    %3 = vector.broadcast %1 : vector<1x2176xf32> to vector<2x2176xf32>
    %4 = arith.mulf %0, %3 : vector<2x2176xf32>
    %5 = vector.broadcast %2 : vector<1x2176xf32> to vector<2x2176xf32>
    %6 = arith.addf %4, %5 : vector<2x2176xf32>
    %c0_4 = arith.constant 0 : index
    %c0_5 = arith.constant 0 : index
    %7 = vector.load %arg3[%c0_4, %c0_5] : memref<2x2176xf32, #tpu.memory_space<vmem>>, vector<2x2176xf32>
    tpu.vector_store %arg3[%c0_4, %c0_5], %6 {strides = array<i32>} : memref<2x2176xf32, #tpu.memory_space<vmem>>, vector<2x2176xf32>,
    return
  }
  func.func @transform_0(%arg0: i32) -> (i32, i32) {
    %c0_i32 = arith.constant 0 : i32
    %c0_i32_0 = arith.constant 0 : i32
    return %arg0, %c0_i32 : i32, i32
  }
  func.func @transform_1(%arg0: i32) -> (i32, i32) {
    %c0_i32 = arith.constant 0 : i32
    %c0_i32_0 = arith.constant 0 : i32
    %c0_i32_1 = arith.constant 0 : i32
    return %c0_i32, %c0_i32_0 : i32, i32
  }
  func.func @transform_2(%arg0: i32) -> (i32, i32) {
    %c0_i32 = arith.constant 0 : i32
    %c0_i32_0 = arith.constant 0 : i32
    return %arg0, %c0_i32 : i32, i32
  }
}

</mosaic_0001>

<llo_original>
// kernel: feature_scaler.1
$region0: #{feature_scaler.1}
  #allocation0 [shape = 'u32[]', space=smem, size = 0x4, offset = 0x4, fixed_abs, tag = 'smem constant byte address 0x4 - core index']
  #allocation1 [shape = 'u32[72,128]{1,0:T(1,128)}', space=vmem, size = 0x9000, scoped, tag = 'internal scratch']
  %s0 = inlined_call_operand.vmem [shape: f32[2,2176], index: 0, kind: input, shape index: {}]
  %s1 = inlined_call_operand.vmem [shape: f32[2,2176], index: 1, kind: input, shape index: {}]
  %s2 = inlined_call_operand.vmem [shape: f32[2,2176], index: 2, kind: output, shape index: {}]
  %s3 = sld [smem:[#allocation0]]
  $region18: #{feature_scaler.1} parent=0
    _
  %s5 = ssub.s32 1, %s3
  %s6 = scalar_select 0, %s5, %s3
  // Predicated region
  $region2: #{feature_scaler.1} parent=0 // pred_check
    _
  $region3: #{feature_scaler.1} parent=0 // pred_check_branch
    %8 = sbr.rel (0) target = $region5
  $region4: #{feature_scaler.1} parent=0 // pred_region
    _
  $region5: #{feature_scaler.1} parent=0 // pred_fallthru
    _
  // Predicated region
  $region6: #{feature_scaler.1} parent=0 // pred_check
    _
  $region7: #{feature_scaler.1} parent=0 // pred_check_branch
    %10 = sbr.rel (0) target = $region9
  $region8: #{feature_scaler.1} parent=0 // pred_region
    _
  $region9: #{feature_scaler.1} parent=0 // pred_fallthru
    _
  %v11 = vld [vmem:[%s0] sm:$0xff]
  %v12 = vld [vmem:[%s0 + $0x8] sm:$0xff]
  %v13 = vld [vmem:[%s0 + $0x10] sm:$0xff]
  %v14 = vld [vmem:[%s0 + $0x18] sm:$0xff]
  %v15 = vld [vmem:[%s0 + $0x20] sm:$0x3]
  %v16 = vld [vmem:[%s1] ss:$2 sm:$0xff]
  %s17 = scalar_lea.vmem %s1, 16
  %v18 = vld [vmem:[%s17] ss:$2 sm:$0xff]
  %s19 = scalar_lea.vmem %s1, 32
  %v20 = vld [vmem:[%s19] ss:$2 sm:$0x1]
  %s21 = scalar_lea.vmem %s1, 1
  %v22 = vld [vmem:[%s21] ss:$2 sm:$0xff]
  %s23 = scalar_lea.vmem %s1, 17
  %v24 = vld [vmem:[%s23] ss:$2 sm:$0xff]
  %s25 = scalar_lea.vmem %s1, 33
  %v26 = vld [vmem:[%s25] ss:$2 sm:$0x1]
  %v30 = vperm.slane %v16, 0
  %v31 = vperm.slane %v16, 1
  %v32 = vperm.slane %v16, 2
  %v33 = vperm.slane %v16, 3
  %v34 = vperm.slane %v16, 4
  %v35 = vperm.slane %v16, 5
  %v36 = vperm.slane %v16, 6
  %v37 = vperm.slane %v16, 7
  %v38 = vperm.slane %v18, 0
  %v39 = vperm.slane %v18, 1
  %v40 = vperm.slane %v18, 2
  %v41 = vperm.slane %v18, 3
  %v42 = vperm.slane %v18, 4
  %v43 = vperm.slane %v18, 5
  %v44 = vperm.slane %v18, 6
  %v45 = vperm.slane %v18, 7
  %v46 = vperm.slane %v20, 0
  %v48 = vrot.slane %v31, 6
  %v49 = vrot.slane %v32, 4
  %v50 = vrot.slane %v33, 2
  %v51 = vrot.slane %v35, 6
  %v52 = vrot.slane %v36, 4
  %v53 = vrot.slane %v37, 2
  %v54 = vrot.slane %v39, 6
  %v55 = vrot.slane %v40, 4
  %v56 = vrot.slane %v41, 2
  %v57 = vrot.slane %v43, 6
  %v58 = vrot.slane %v44, 4
  %v59 = vrot.slane %v45, 2
  %vm60 = vcmask 1041408
  %v61 = vsel %vm60, %v30, %v48
  %vm62 = vcmask 1045508
  %v63 = vsel %vm62, %v49, %v50
  %vm64 = vcmask 1043456
  %v65 = vsel %vm64, %v61, %v63
  %v66 = vsel %vm60, %v34, %v51
  %v67 = vsel %vm62, %v52, %v53
  %v68 = vsel %vm64, %v66, %v67
  %v69 = vsel %vm60, %v38, %v54
  %v70 = vsel %vm62, %v55, %v56
  %v71 = vsel %vm64, %v69, %v70
  %v72 = vsel %vm60, %v42, %v57
  %v73 = vsel %vm62, %v58, %v59
  %v74 = vsel %vm64, %v72, %v73
  %v79 = vmul.f32 %v11, %v65
  %v80 = vmul.f32 %v12, %v68
  %v81 = vmul.f32 %v13, %v71
  %v82 = vmul.f32 %v14, %v74
  %v83 = vmul.f32 %v15, %v46
  %v87 = vperm.slane %v22, 0
  %v88 = vperm.slane %v22, 1
  %v89 = vperm.slane %v22, 2
  %v90 = vperm.slane %v22, 3
  %v91 = vperm.slane %v22, 4
  %v92 = vperm.slane %v22, 5
  %v93 = vperm.slane %v22, 6
  %v94 = vperm.slane %v22, 7
  %v95 = vperm.slane %v24, 0
  %v96 = vperm.slane %v24, 1
  %v97 = vperm.slane %v24, 2
  %v98 = vperm.slane %v24, 3
  %v99 = vperm.slane %v24, 4
  %v100 = vperm.slane %v24, 5
  %v101 = vperm.slane %v24, 6
  %v102 = vperm.slane %v24, 7
  %v103 = vperm.slane %v26, 0
  %v105 = vrot.slane %v88, 6
  %v106 = vrot.slane %v89, 4
  %v107 = vrot.slane %v90, 2
  %v108 = vrot.slane %v92, 6
  %v109 = vrot.slane %v93, 4
  %v110 = vrot.slane %v94, 2
  %v111 = vrot.slane %v96, 6
  %v112 = vrot.slane %v97, 4
  %v113 = vrot.slane %v98, 2
  %v114 = vrot.slane %v100, 6
  %v115 = vrot.slane %v101, 4
  %v116 = vrot.slane %v102, 2
  %v117 = vsel %vm60, %v87, %v105
  %v118 = vsel %vm62, %v106, %v107
  %v119 = vsel %vm64, %v117, %v118
  %v120 = vsel %vm60, %v91, %v108
  %v121 = vsel %vm62, %v109, %v110
  %v122 = vsel %vm64, %v120, %v121
  %v123 = vsel %vm60, %v95, %v111
  %v124 = vsel %vm62, %v112, %v113
  %v125 = vsel %vm64, %v123, %v124
  %v126 = vsel %vm60, %v99, %v114
  %v127 = vsel %vm62, %v115, %v116
  %v128 = vsel %vm64, %v126, %v127
  %v133 = vadd.f32 %v79, %v119
  %v134 = vadd.f32 %v80, %v122
  %v135 = vadd.f32 %v81, %v125
  %v136 = vadd.f32 %v82, %v128
  %v137 = vadd.f32 %v83, %v103
  %138 = vst [vmem:[%s2] sm:$0xff] %v133
  %139 = vst [vmem:[%s2 + $0x8] sm:$0xff] %v134
  %140 = vst [vmem:[%s2 + $0x10] sm:$0xff] %v135
  %141 = vst [vmem:[%s2 + $0x18] sm:$0xff] %v136
  %142 = vst [vmem:[%s2 + $0x20] sm:$0x3] %v137
  // Predicated region
  $region10: #{feature_scaler.1} parent=0 // pred_check
    _
  $region11: #{feature_scaler.1} parent=0 // pred_check_branch
    %144 = sbr.rel (0) target = $region13
  $region12: #{feature_scaler.1} parent=0 // pred_region
    _
  $region13: #{feature_scaler.1} parent=0 // pred_fallthru
    _
  // Predicated region
  $region14: #{feature_scaler.1} parent=0 // pred_check
    _
  $region15: #{feature_scaler.1} parent=0 // pred_check_branch
    %146 = sbr.rel (0) target = $region17
  $region16: #{feature_scaler.1} parent=0 // pred_region
    _
  $region17: #{feature_scaler.1} parent=0 // pred_fallthru
    _

</llo_original>
